<compile_context>
chip_gen: v6e
topology: v6e:2x2x1
jax: 0.10.0
libtpu: 0.0.40
codegen_flags: <defaults>
</compile_context>

<pallas_src>
import functools
import math

import jax
import jax.numpy as jnp
from jax.experimental import pallas as pl
from jax.experimental.pallas import tpu as pltpu

_EPS = 1e-12


def _cosface_kernel(xs_ref, w_ref, y_ref, o_ref, *, s, m, tile_c):
    # xs_ref: (B, D)      = s * L2-normalized(x), precomputed once in the wrapper
    # w_ref : (TILE_C, D) = raw weight tile (each tile is visited exactly once)
    # y_ref : (B, 1)      = int32 labels
    # o_ref : (B, TILE_C) = output logits tile
    w = w_ref[...]

    # Row-wise L2 normalization of the W tile via rsqrt (EUP) + multiply (VPU).
    sumsq = jnp.sum(w * w, axis=-1, keepdims=True)
    wn = w * jax.lax.rsqrt(jnp.maximum(sumsq, _EPS * _EPS))

    # (B, TILE_C) = xs @ wn^T, contracting the shared D axis directly on the
    # MXU -- no materialized transpose.
    logits_s = jax.lax.dot_general(
        xs_ref[...],
        wn,
        dimension_numbers=(((1,), (1,)), ((), ())),
        preferred_element_type=jnp.float32,
    )

    # Subtract s*m only where the global class index matches the label.
    col_off = pl.program_id(0) * tile_c
    col_ids = jax.lax.broadcasted_iota(jnp.int32, logits_s.shape, 1) + col_off
    mask = col_ids == y_ref[...]
    o_ref[...] = jnp.where(mask, logits_s - (s * m), logits_s)


def _pick_tile_c(c_pad, max_tile=1024):
    """Largest multiple-of-128 divisor of c_pad, capped at max_tile, preferring
    a grid of >= 2 steps so v7x's two TensorCores both get work."""
    best = 128
    for t in range(128, min(c_pad, max_tile) + 1, 128):
        if c_pad % t == 0 and (c_pad // t >= 2 or c_pad <= 128):
            best = t
    return best


@functools.partial(jax.jit, static_argnames=("s", "m", "tile_c"))
def cosface_forward(x, W, y, *, s=30.0, m=0.5, tile_c=None):
    """x: (B, D) f32, W: (C, D) f32, y: (B,) int -> (B, C) f32 logits."""
    B, D = x.shape
    C, D2 = W.shape
    assert D == D2

    # ---- hoisted, once-per-call work (not repeated per class tile) ----------
    x = x.astype(jnp.float32)
    inv_xn = jax.lax.rsqrt(
        jnp.maximum(jnp.sum(x * x, axis=-1, keepdims=True), _EPS * _EPS)
    )
    xs = x * (s * inv_xn)  # fold the CosFace scale into the normalized x

    y2 = y.astype(jnp.int32).reshape(B, 1)

    # ---- class-dim padding + tile selection ---------------------------------
    C_pad = ((C + 127) // 128) * 128
    if tile_c is None:
        tile_c = _pick_tile_c(C_pad)
    assert C_pad % tile_c == 0
    W_pad = W if C_pad == C else jnp.pad(W, ((0, C_pad - C), (0, 0)))

    grid = (C_pad // tile_c,)

    # ---- explicit VMEM budget (double-buffered W + out tiles, resident x/y) -
    vmem_bytes = (
        2 * tile_c * D * 4      # W tile, double-buffered
        + 2 * B * tile_c * 4    # output tile, double-buffered
        + 2 * (B * D + B) * 4   # xs + labels (constant index_map blocks)
        + (2 << 20)             # slack
    )
    vmem_limit = int(min(max(vmem_bytes, 16 << 20), 48 << 20))

    kernel = functools.partial(_cosface_kernel, s=s, m=m, tile_c=tile_c)

    out = pl.pallas_call(
        kernel,
        out_shape=jax.ShapeDtypeStruct((B, C_pad), jnp.float32),
        grid_spec=pltpu.PrefetchScalarGridSpec(
            num_scalar_prefetch=0,
            grid=grid,
            in_specs=[
                pl.BlockSpec((B, D), lambda j: (0, 0)),       # xs (whole, resident)
                pl.BlockSpec((tile_c, D), lambda j: (j, 0)),  # W tile of classes
                pl.BlockSpec((B, 1), lambda j: (0, 0)),       # labels (whole)
            ],
            out_specs=pl.BlockSpec((B, tile_c), lambda j: (0, j)),
        ),
        compiler_params=pltpu.CompilerParams(
            dimension_semantics=("parallel",),
            vmem_limit_bytes=vmem_limit,
        ),
    )(xs, W_pad, y2)

    return out[:, :C] if C_pad != C else out


def _reference(x, W, y, s, m):
    xn = x / jnp.maximum(jnp.linalg.norm(x, axis=1, keepdims=True), _EPS)
    wn = W / jnp.maximum(jnp.linalg.norm(W, axis=1, keepdims=True), _EPS)
    logits = xn @ wn.T
    one_hot = jax.nn.one_hot(y, W.shape[0], dtype=jnp.float32)
    return s * (logits - m * one_hot)


if __name__ == "__main__":
    # args.in_features = 128, args.out_features = 256, args.s = 30.0
    B, D, C = 8, 128, 256
    s, m = 30.0, 0.5

    key = jax.random.PRNGKey(0)
    kx, kw, ky = jax.random.split(key, 3)

    x = jax.random.normal(kx, (B, D), dtype=jnp.float32)
    # Xavier/Glorot uniform init for W of shape (out_features, in_features).
    bound = math.sqrt(6.0 / (D + C))
    W = jax.random.uniform(kw, (C, D), dtype=jnp.float32, minval=-bound, maxval=bound)
    y = jax.random.randint(ky, (B,), 0, C, dtype=jnp.int32)

    out = cosface_forward(x, W, y, s=s, m=m)
    out = jax.block_until_ready(out)

    ref = _reference(x, W, y, s, m)
    assert out.shape == (B, C)
    assert jnp.allclose(out, ref, atol=1e-4, rtol=1e-4), "mismatch vs reference"

    print("KERNEL_OK")
</pallas_src>

<mosaic_0001>
module attributes {stable_mosaic.version = 11 : i64} {
  func.func @_cosface_kernel(%arg0: i32, %arg1: memref<8x128xf32, #tpu.memory_space<vmem>>, %arg2: memref<128x128xf32, #tpu.memory_space<vmem>>, %arg3: memref<8x1xi32, #tpu.memory_space<vmem>>, %arg4: memref<8x128xf32, #tpu.memory_space<vmem>>) attributes {dimension_semantics = [#tpu.dimension_semantics<parallel>], iteration_bounds = array<i64: 2>, scalar_prefetch = 0 : i64, scratch_operands = 0 : i64, tpu.core_type = #tpu.core_type<tc>, window_params = [{pipeline_mode = #tpu.pipeline_mode<synchronous>, transform_indices = @transform_0, window_bounds = array<i64: 8, 128>}, {transform_indices = @transform_1, window_bounds = array<i64: 128, 128>}, {pipeline_mode = #tpu.pipeline_mode<synchronous>, transform_indices = @transform_2, window_bounds = array<i64: 8, 1>}, {transform_indices = @transform_3, window_bounds = array<i64: 8, 128>}]} {
    %c0 = arith.constant 0 : index
    %c0_0 = arith.constant 0 : index
    %0 = vector.load %arg2[%c0, %c0_0] : memref<128x128xf32, #tpu.memory_space<vmem>>, vector<128x128xf32>
    %1 = arith.mulf %0, %0 : vector<128x128xf32>
    %cst = arith.constant dense<0.000000e+00> : vector<128xf32>
    %2 = vector.multi_reduction <add>, %1, %cst [1] : vector<128x128xf32> to vector<128xf32>
    %3 = vector.shape_cast %2 : vector<128xf32> to vector<128x1xf32>
    %cst_1 = arith.constant 1.000000e-24 : f32
    %4 = vector.broadcast %cst_1 : f32 to vector<128x1xf32>
    %5 = arith.maximumf %3, %4 : vector<128x1xf32>
    %6 = math.rsqrt %5 : vector<128x1xf32>
    %7 = vector.broadcast %6 : vector<128x1xf32> to vector<128x128xf32>
    %8 = arith.mulf %0, %7 : vector<128x128xf32>
    %c0_2 = arith.constant 0 : index
    %c0_3 = arith.constant 0 : index
    %9 = vector.load %arg1[%c0_2, %c0_3] : memref<8x128xf32, #tpu.memory_space<vmem>>, vector<8x128xf32>
    %cst_4 = arith.constant dense<0.000000e+00> : vector<8x128xf32>
    %10 = tpu.matmul %9, %8, %cst_4 {dimension_numbers = #tpu.dot_dimension_numbers<[1], [1], [0], [0], [0, 0, 1, 0], [], []>} : vector<8x128xf32>, vector<128x128xf32>, vector<8x128xf32> -> vector<8x128xf32>
    %c128_i32 = arith.constant 128 : i32
    %11 = arith.muli %arg0, %c128_i32 : i32
    %12 = tpu.iota {dimensions = array<i32: 1>} : vector<8x128xi32>
    %13 = vector.broadcast %11 : i32 to vector<8x128xi32>
    %14 = arith.addi %12, %13 : vector<8x128xi32>
    %c0_5 = arith.constant 0 : index
    %c0_6 = arith.constant 0 : index
    %15 = vector.load %arg3[%c0_5, %c0_6] : memref<8x1xi32, #tpu.memory_space<vmem>>, vector<8x1xi32>
    %16 = vector.broadcast %15 : vector<8x1xi32> to vector<8x128xi32>
    %17 = arith.cmpi eq, %14, %16 : vector<8x128xi32>
    %cst_7 = arith.constant 1.500000e+01 : f32
    %18 = vector.broadcast %cst_7 : f32 to vector<8x128xf32>
    %19 = arith.subf %10, %18 : vector<8x128xf32>
    %20 = arith.select %17, %19, %10 : vector<8x128xi1>, vector<8x128xf32>
    %c0_8 = arith.constant 0 : index
    %c0_9 = arith.constant 0 : index
    %21 = vector.load %arg4[%c0_8, %c0_9] : memref<8x128xf32, #tpu.memory_space<vmem>>, vector<8x128xf32>
    tpu.vector_store %arg4[%c0_8, %c0_9], %20 {strides = array<i32>} : memref<8x128xf32, #tpu.memory_space<vmem>>, vector<8x128xf32>,
    return
  }
  func.func @transform_0(%arg0: i32) -> (i32, i32) {
    %c0_i32 = arith.constant 0 : i32
    %c0_i32_0 = arith.constant 0 : i32
    %c0_i32_1 = arith.constant 0 : i32
    return %c0_i32, %c0_i32_0 : i32, i32
  }
  func.func @transform_1(%arg0: i32) -> (i32, i32) {
    %c0_i32 = arith.constant 0 : i32
    %c0_i32_0 = arith.constant 0 : i32
    return %arg0, %c0_i32 : i32, i32
  }
  func.func @transform_2(%arg0: i32) -> (i32, i32) {
    %c0_i32 = arith.constant 0 : i32
    %c0_i32_0 = arith.constant 0 : i32
    %c0_i32_1 = arith.constant 0 : i32
    return %c0_i32, %c0_i32_0 : i32, i32
  }
  func.func @transform_3(%arg0: i32) -> (i32, i32) {
    %c0_i32 = arith.constant 0 : i32
    %c0_i32_0 = arith.constant 0 : i32
    return %c0_i32, %arg0 : i32, i32
  }
}

</mosaic_0001>

<llo_original>
// kernel: cosface_forward.1
$region0: #{cosface_forward.1}
  #allocation0 [shape = 'u32[]', space=smem, size = 0x4, offset = 0x4, fixed_abs, tag = 'smem constant byte address 0x4 - core index']
  #allocation1 [shape = 'u32[144,128]{1,0:T(1,128)}', space=vmem, size = 0x12000, scoped, tag = 'internal scratch']
  %s0 = inlined_call_operand.vmem [shape: f32[8,128], index: 0, kind: input, shape index: {}]
  %s1 = inlined_call_operand.hbm [shape: f32[256,128], index: 1, kind: input, shape index: {}]
  %s2 = inlined_call_operand.vmem [shape: s32[8,1], index: 2, kind: input, shape index: {}]
  %s3 = inlined_call_operand.hbm [shape: f32[8,256], index: 3, kind: output, shape index: {}]
  %s4 = sld [smem:[#allocation0]]
  $region49: #{cosface_forward.1} parent=0
    _
  %s6 = ssub.s32 1, %s4
  %s7 = scalar_select 0, %s6, %s4
  $region1: #{cosface_forward.1} parent=0
    #allocation2 [shape = 'u8[131072]{0}', space=vmem, size = 0x20000, scoped, tag = 'input window, operand 1']
    #allocation3 [shape = 's32[2]{0}', space=sflag, size = 0x8, scoped, tag = 'scoped memory for cosface_forward.1']
    #allocation4 [shape = 's32[2]{0}', space=sflag, size = 0x8, scoped, tag = 'scoped memory for cosface_forward.1']
    #allocation5 [shape = 'u8[8192]{0}', space=vmem, size = 0x2000, scoped, tag = 'output window, operand 0']
    %8 = vsyncpa [#allocation3], 0
    %s9 = scalar_lea.sflag [#allocation3], 1
    %10 = vsyncpa %s9, 0
    %11 = vsyncpa [#allocation4], 0
    %s12 = scalar_lea.sflag [#allocation4], 1
    %13 = vsyncpa %s12, 0
    loop: start=0, step=1, limit=4
    $region2: #{cosface_forward.1} parent=1 // loop_pre_header
      _
    $region3: #{cosface_forward.1} parent=1 // loop_header
      %s15 = sphi 0, %s19
      %p16 = scmp.ge.s32.totalorder %s15, 4
      %s23 = sphi 0, %s23
      %s25 = sphi 0, %s23
      %s26 = sphi 0, %s25
      %s40 = sphi 0, %s26
      %s46 = sphi 0, %s48
      %s49 = sphi 0, %s46
      %s50 = sphi 0, %s49
      %s66 = sphi 0, %s50
      %s70 = sphi 0, %s70
      %s72 = sphi 0, %s70
      %s73 = sphi 0, %s72
      %s87 = sphi 0, %s73
      %s93 = sphi 0, %s95
      %s96 = sphi 0, %s93
      %s97 = sphi 0, %s96
      %s113 = sphi 0, %s97
    $region4: #{cosface_forward.1} parent=1 // loop_header_branch
      %18 = sbr.rel (%p16) target = $region8
    $region5: #{cosface_forward.1} parent=1 // loop_body
      %s20 = ssub.s32 %s15, 1
      %s21 = ssub.s32 %s15, 2
      %s22 = sadd.s32 %s15, 1
      %s24 = sadd.s32 %s23, 1
      %p27 = scmp.eq.s32.totalorder %s15, 1
      %p28 = scmp.ne.s32.totalorder %s23, %s25
      %p29 = scmp.eq.s32.totalorder %s15, 0
      %p30 = por %p28, %p29
      %p31 = scmp.ne.s32.totalorder %s23, %s25
      %p32 = scmp.eq.s32.totalorder %s20, 1
      %p33 = por %p31, %p32
      %p34 = scmp.ne.s32.totalorder %s25, %s26
      %p35 = scmp.eq.s32.totalorder %s20, 0
      %p36 = por %p34, %p35
      %p37 = scmp.ne.s32.totalorder %s25, %s26
      %p38 = scmp.eq.s32.totalorder %s21, 1
      %p39 = por %p37, %p38
      %p41 = scmp.ne.s32.totalorder %s26, %s40
      %p42 = scmp.eq.s32.totalorder %s21, 0
      %p43 = por %p41, %p42
      %s44 = ssub.s32 %s15, %s22
      %p45 = scmp.eq.s32.totalorder %s44, 0
      %s47 = sadd.s32 %s46, 1
      %s48 = scalar_select %p45, %s46, %s47
      %p51 = pneg %p45
      %p52 = scmp.eq.s32.totalorder %s15, 1
      %p53 = por %p51, %p52
      %p54 = scmp.ne.s32.totalorder %s46, %s49
      %p55 = scmp.eq.s32.totalorder %s15, 0
      %p56 = por %p54, %p55
      %p57 = scmp.ne.s32.totalorder %s46, %s49
      %p58 = scmp.eq.s32.totalorder %s20, 1
      %p59 = por %p57, %p58
      %p60 = scmp.ne.s32.totalorder %s49, %s50
      %p61 = scmp.eq.s32.totalorder %s20, 0
      %p62 = por %p60, %p61
      %p63 = scmp.ne.s32.totalorder %s49, %s50
      %p64 = scmp.eq.s32.totalorder %s21, 1
      %p65 = por %p63, %p64
      %p67 = scmp.ne.s32.totalorder %s50, %s66
      %p68 = scmp.eq.s32.totalorder %s21, 0
      %p69 = por %p67, %p68
      %s71 = sadd.s32 %s70, 1
      %p74 = scmp.eq.s32.totalorder %s15, 1
      %p75 = scmp.ne.s32.totalorder %s70, %s72
      %p76 = scmp.eq.s32.totalorder %s15, 0
      %p77 = por %p75, %p76
      %p78 = scmp.ne.s32.totalorder %s70, %s72
      %p79 = scmp.eq.s32.totalorder %s20, 1
      %p80 = por %p78, %p79
      %p81 = scmp.ne.s32.totalorder %s72, %s73
      %p82 = scmp.eq.s32.totalorder %s20, 0
      %p83 = por %p81, %p82
      %p84 = scmp.ne.s32.totalorder %s72, %s73
      %p85 = scmp.eq.s32.totalorder %s21, 1
      %p86 = por %p84, %p85
      %p88 = scmp.ne.s32.totalorder %s73, %s87
      %p89 = scmp.eq.s32.totalorder %s21, 0
      %p90 = por %p88, %p89
      %s91 = ssub.s32 %s15, %s22
      %p92 = scmp.eq.s32.totalorder %s91, 0
      %s94 = sadd.s32 %s93, 1
      %s95 = scalar_select %p92, %s93, %s94
      %p98 = pneg %p92
      %p99 = scmp.eq.s32.totalorder %s15, 1
      %p100 = por %p98, %p99
      %p101 = scmp.ne.s32.totalorder %s93, %s96
      %p102 = scmp.eq.s32.totalorder %s15, 0
      %p103 = por %p101, %p102
      %p104 = scmp.ne.s32.totalorder %s93, %s96
      %p105 = scmp.eq.s32.totalorder %s20, 1
      %p106 = por %p104, %p105
      %p107 = scmp.ne.s32.totalorder %s96, %s97
      %p108 = scmp.eq.s32.totalorder %s20, 0
      %p109 = por %p107, %p108
      %p110 = scmp.ne.s32.totalorder %s96, %s97
      %p111 = scmp.eq.s32.totalorder %s21, 1
      %p112 = por %p110, %p111
      %p114 = scmp.ne.s32.totalorder %s97, %s113
      %p115 = scmp.eq.s32.totalorder %s21, 0
      %p116 = por %p114, %p115
      %p117 = scmp.le.s32.totalorder 1, %s15
      %p118 = scmp.lt.s32.totalorder %s15, 3
      %p119 = pnand %p117, %p118
      %p120 = pneg %p119
      // Predicated region
      $region9: #{cosface_forward.1} parent=5 // pred_check
        _
      $region10: #{cosface_forward.1} parent=5 // pred_check_branch
        %122 = sbr.rel (%p119) target = $region12
      $region11: #{cosface_forward.1} parent=5 // pred_region
        %s123 = ssub.s32 %s15, 1
        // Predicated region
        $region13: #{cosface_forward.1} parent=11 // pred_check
          %p124 = pneg %p36
        $region14: #{cosface_forward.1} parent=11 // pred_check_branch
          %126 = sbr.rel (%p124) target = $region16
        $region15: #{cosface_forward.1} parent=11 // pred_region
          _
        $region16: #{cosface_forward.1} parent=11 // pred_fallthru
          _
        // Predicated region
        $region17: #{cosface_forward.1} parent=11 // pred_check
          %p127 = pneg %p83
        $region18: #{cosface_forward.1} parent=11 // pred_check_branch
          %129 = sbr.rel (%p127) target = $region20
        $region19: #{cosface_forward.1} parent=11 // pred_region
          _
        $region20: #{cosface_forward.1} parent=11 // pred_fallthru
          _
      $region12: #{cosface_forward.1} parent=5 // pred_fallthru
        _
      %p130 = scmp.lt.s32.totalorder %s15, 2
      // Predicated region
      $region21: #{cosface_forward.1} parent=5 // pred_check
        %p131 = pneg %p130
      $region22: #{cosface_forward.1} parent=5 // pred_check_branch
        %133 = sbr.rel (%p131) target = $region24
      $region23: #{cosface_forward.1} parent=5 // pred_region
        // Predicated region
        $region25: #{cosface_forward.1} parent=23 // pred_check
          %p134 = pneg %p56
        $region26: #{cosface_forward.1} parent=23 // pred_check_branch
          %136 = sbr.rel (%p134) target = $region28
        $region27: #{cosface_forward.1} parent=23 // pred_region
          %s137 = sand.u32 %s46, 1
          %s138 = scalar_lea.sflag [#allocation3], %s137
          %s139 = sand.u32 %s46, 1
          %s140 = smul.addr %s139, 128
          %s141 = scalar_lea.vmem [#allocation2], %s140
          %s142 = smul.u32 16, %s15
          %s144 = ssub.s32 2048, 2048
          %145 = vsyncadd %s138, %s144
          %s146 = smul.addr %s142, 128
          %s147 = scalar_lea.hbm %s1, %s146
          %s148 = sshll.u32 %s141, 4
          %s149 = int_to_ptr.vmem [resolvable:$true] %s148
          %154 = dma.hbm_to_vmem [thread:$0]  %s147, 2048, %s149, %s138, 128, 128, 8
        $region28: #{cosface_forward.1} parent=23 // pred_fallthru
          _
      $region24: #{cosface_forward.1} parent=5 // pred_fallthru
        _
      %p155 = scmp.le.s32.totalorder 1, %s15
      %p156 = scmp.lt.s32.totalorder %s15, 3
      %p157 = pnand %p155, %p156
      %p158 = pneg %p157
      // Predicated region
      $region29: #{cosface_forward.1} parent=5 // pred_check
        _
      $region30: #{cosface_forward.1} parent=5 // pred_check_branch
        %160 = sbr.rel (%p157) target = $region32
      $region31: #{cosface_forward.1} parent=5 // pred_region
        %s161 = ssub.s32 %s15, 1
        %s162 = sand.u32 %s49, 1
        %s163 = scalar_lea.sflag [#allocation3], %s162
        %s164 = sand.u32 %s49, 1
        %s165 = smul.addr %s164, 128
        %s166 = scalar_lea.vmem [#allocation2], %s165
        // Predicated region
        $region33: #{cosface_forward.1} parent=31 // pred_check
          %p167 = pneg %p62
        $region34: #{cosface_forward.1} parent=31 // pred_check_branch
          %169 = sbr.rel (%p167) target = $region36
        $region35: #{cosface_forward.1} parent=31 // pred_region
          %170 = dma.done %s163, 2048
        $region36: #{cosface_forward.1} parent=31 // pred_fallthru
          _
        %p171 = pneg %p36
        %p172 = pneg %p33
        %s173 = sand.u32 %s49, 1
        %s174 = scalar_lea.sflag [#allocation3], %s173
        %s175 = sand.u32 %s49, 1
        %s176 = smul.addr %s175, 128
        %s177 = scalar_lea.vmem [#allocation2], %s176
        %p178 = pneg %p62
        %p179 = pneg %p59
        %p180 = pneg %p83
        %p181 = pneg %p80
        %p182 = pneg %p109
        %p183 = pneg %p106
        %s184 = sand.u32 %s96, 1
        %s185 = scalar_lea.sflag [#allocation4], %s184
        %s186 = sand.u32 %s96, 1
        %s187 = smul.addr %s186, 8
        %s188 = scalar_lea.vmem [#allocation5], %s187
        %s189 = smul.u32 16, %s20
        %v190 = vld [vmem:[%s166] sm:$0xff]
        %v191 = vld [vmem:[%s166 + $0x8] sm:$0xff]
        %v192 = vld [vmem:[%s166 + $0x10] sm:$0xff]
        %v193 = vld [vmem:[%s166 + $0x18] sm:$0xff]
        %v194 = vld [vmem:[%s166 + $0x20] sm:$0xff]
        %v195 = vld [vmem:[%s166 + $0x28] sm:$0xff]
        %v196 = vld [vmem:[%s166 + $0x30] sm:$0xff]
        %v197 = vld [vmem:[%s166 + $0x38] sm:$0xff]
        %v198 = vld [vmem:[%s166 + $0x40] sm:$0xff]
        %v199 = vld [vmem:[%s166 + $0x48] sm:$0xff]
        %v200 = vld [vmem:[%s166 + $0x50] sm:$0xff]
        %v201 = vld [vmem:[%s166 + $0x58] sm:$0xff]
        %v202 = vld [vmem:[%s166 + $0x60] sm:$0xff]
        %v203 = vld [vmem:[%s166 + $0x68] sm:$0xff]
        %v204 = vld [vmem:[%s166 + $0x70] sm:$0xff]
        %v205 = vld [vmem:[%s166 + $0x78] sm:$0xff]
        %v206 = vmul.f32 %v190, %v190
        %v207 = vmul.f32 %v191, %v191
        %v208 = vmul.f32 %v192, %v192
        %v209 = vmul.f32 %v193, %v193
        %v210 = vmul.f32 %v194, %v194
        %v211 = vmul.f32 %v195, %v195
        %v212 = vmul.f32 %v196, %v196
        %v213 = vmul.f32 %v197, %v197
        %v214 = vmul.f32 %v198, %v198
        %v215 = vmul.f32 %v199, %v199
        %v216 = vmul.f32 %v200, %v200
        %v217 = vmul.f32 %v201, %v201
        %v218 = vmul.f32 %v202, %v202
        %v219 = vmul.f32 %v203, %v203
        %v220 = vmul.f32 %v204, %v204
        %v221 = vmul.f32 %v205, %v205
        %222 = vadd.xlane.f32.xlu0 %v206
        %v223 = vpop.xlane.xlu0 %222
        %224 = vadd.xlane.f32.xlu0 %v207
        %v225 = vpop.xlane.xlu0 %224
        %226 = vadd.xlane.f32.xlu0 %v208
        %v227 = vpop.xlane.xlu0 %226
        %228 = vadd.xlane.f32.xlu0 %v209
        %v229 = vpop.xlane.xlu0 %228
        %230 = vadd.xlane.f32.xlu0 %v210
        %v231 = vpop.xlane.xlu0 %230
        %232 = vadd.xlane.f32.xlu0 %v211
        %v233 = vpop.xlane.xlu0 %232
        %234 = vadd.xlane.f32.xlu0 %v212
        %v235 = vpop.xlane.xlu0 %234
        %236 = vadd.xlane.f32.xlu0 %v213
        %v237 = vpop.xlane.xlu0 %236
        %238 = vadd.xlane.f32.xlu0 %v214
        %v239 = vpop.xlane.xlu0 %238
        %240 = vadd.xlane.f32.xlu0 %v215
        %v241 = vpop.xlane.xlu0 %240
        %242 = vadd.xlane.f32.xlu0 %v216
        %v243 = vpop.xlane.xlu0 %242
        %244 = vadd.xlane.f32.xlu0 %v217
        %v245 = vpop.xlane.xlu0 %244
        %246 = vadd.xlane.f32.xlu0 %v218
        %v247 = vpop.xlane.xlu0 %246
        %248 = vadd.xlane.f32.xlu0 %v219
        %v249 = vpop.xlane.xlu0 %248
        %250 = vadd.xlane.f32.xlu0 %v220
        %v251 = vpop.xlane.xlu0 %250
        %252 = vadd.xlane.f32.xlu0 %v221
        %v253 = vpop.xlane.xlu0 %252
        %v254 = vmax.f32 %v223, 1e-24
        %v255 = vmax.f32 %v225, 1e-24
        %v256 = vmax.f32 %v227, 1e-24
        %v257 = vmax.f32 %v229, 1e-24
        %v258 = vmax.f32 %v231, 1e-24
        %v259 = vmax.f32 %v233, 1e-24
        %v260 = vmax.f32 %v235, 1e-24
        %v261 = vmax.f32 %v237, 1e-24
        %v262 = vmax.f32 %v239, 1e-24
        %v263 = vmax.f32 %v241, 1e-24
        %v264 = vmax.f32 %v243, 1e-24
        %v265 = vmax.f32 %v245, 1e-24
        %v266 = vmax.f32 %v247, 1e-24
        %v267 = vmax.f32 %v249, 1e-24
        %v268 = vmax.f32 %v251, 1e-24
        %v269 = vmax.f32 %v253, 1e-24
        %v270 = vrsqrt.pop %v254
        %v271 = vrsqrt.pop %v255
        %v272 = vrsqrt.pop %v256
        %v273 = vrsqrt.pop %v257
        %v274 = vrsqrt.pop %v258
        %v275 = vrsqrt.pop %v259
        %v276 = vrsqrt.pop %v260
        %v277 = vrsqrt.pop %v261
        %v278 = vrsqrt.pop %v262
        %v279 = vrsqrt.pop %v263
        %v280 = vrsqrt.pop %v264
        %v281 = vrsqrt.pop %v265
        %v282 = vrsqrt.pop %v266
        %v283 = vrsqrt.pop %v267
        %v284 = vrsqrt.pop %v268
        %v285 = vrsqrt.pop %v269
        %v286 = vmul.f32 %v190, %v270
        %v287 = vmul.f32 %v191, %v271
        %v288 = vmul.f32 %v192, %v272
        %v289 = vmul.f32 %v193, %v273
        %v290 = vmul.f32 %v194, %v274
        %v291 = vmul.f32 %v195, %v275
        %v292 = vmul.f32 %v196, %v276
        %v293 = vmul.f32 %v197, %v277
        %v294 = vmul.f32 %v198, %v278
        %v295 = vmul.f32 %v199, %v279
        %v296 = vmul.f32 %v200, %v280
        %v297 = vmul.f32 %v201, %v281
        %v298 = vmul.f32 %v202, %v282
        %v299 = vmul.f32 %v203, %v283
        %v300 = vmul.f32 %v204, %v284
        %v301 = vmul.f32 %v205, %v285
        %v302 = vld [vmem:[%s0] sm:$0xff]
        %303 = vmatprep.subr.mxu0 0.0
        %304 = vmatpush1.xpose.msra.mxu0 %v301
        %305 = vmatprep.subr.mxu0 0.0
        %306 = vmatpush1.xpose.msra.mxu0 %v300
        %307 = vmatprep.subr.mxu0 0.0
        %308 = vmatpush1.xpose.msra.mxu0 %v299
        %309 = vmatprep.subr.mxu0 0.0
        %310 = vmatpush1.xpose.msra.mxu0 %v298
        %311 = vmatprep.subr.mxu0 0.0
        %312 = vmatpush1.xpose.msra.mxu0 %v297
        %313 = vmatprep.subr.mxu0 0.0
        %314 = vmatpush1.xpose.msra.mxu0 %v296
        %315 = vmatprep.subr.mxu0 0.0
        %316 = vmatpush1.xpose.msra.mxu0 %v295
        %317 = vmatprep.subr.mxu0 0.0
        %318 = vmatpush1.xpose.msra.mxu0 %v294
        %319 = vmatprep.subr.mxu0 0.0
        %320 = vmatpush1.xpose.msra.mxu0 %v293
        %321 = vmatprep.subr.mxu0 0.0
        %322 = vmatpush1.xpose.msra.mxu0 %v292
        %323 = vmatprep.subr.mxu0 0.0
        %324 = vmatpush1.xpose.msra.mxu0 %v291
        %325 = vmatprep.subr.mxu0 0.0
        %326 = vmatpush1.xpose.msra.mxu0 %v290
        %327 = vmatprep.subr.mxu0 0.0
        %328 = vmatpush1.xpose.msra.mxu0 %v289
        %329 = vmatprep.subr.mxu0 0.0
        %330 = vmatpush1.xpose.msra.mxu0 %v288
        %331 = vmatprep.subr.mxu0 0.0
        %332 = vmatpush1.xpose.msra.mxu0 %v287
        %333 = vmatprep.subr.mxu0 0.0
        %334 = vmatpush1.xpose.msra.mxu0 %v286
        %335 = vmatprep.subr.mxu0 0.0
        %336 = vmatpush2.xpose.msra.mxu0 0.0
        %337 = vmatprep.subr.mxu0 0.0
        %338 = vmatpush2.xpose.msra.mxu0 0.0
        %339 = vmatprep.subr.mxu0 0.0
        %340 = vmatpush2.xpose.msra.mxu0 0.0
        %341 = vmatprep.subr.mxu0 0.0
        %342 = vmatpush2.xpose.msra.mxu0 0.0
        %343 = vmatprep.subr.mxu0 0.0
        %344 = vmatpush2.xpose.msra.mxu0 0.0
        %345 = vmatprep.subr.mxu0 0.0
        %346 = vmatpush2.xpose.msra.mxu0 0.0
        %347 = vmatprep.subr.mxu0 0.0
        %348 = vmatpush2.xpose.msra.mxu0 0.0
        %349 = vmatprep.subr.mxu0 0.0
        %350 = vmatpush2.xpose.msra.mxu0 0.0
        %351 = vmatprep.subr.mxu0 0.0
        %352 = vmatpush2.xpose.msra.mxu0 0.0
        %353 = vmatprep.subr.mxu0 0.0
        %354 = vmatpush2.xpose.msra.mxu0 0.0
        %355 = vmatprep.subr.mxu0 0.0
        %356 = vmatpush2.xpose.msra.mxu0 0.0
        %357 = vmatprep.subr.mxu0 0.0
        %358 = vmatpush2.xpose.msra.mxu0 0.0
        %359 = vmatprep.subr.mxu0 0.0
        %360 = vmatpush2.xpose.msra.mxu0 0.0
        %361 = vmatprep.subr.mxu0 0.0
        %362 = vmatpush2.xpose.msra.mxu0 0.0
        %363 = vmatprep.subr.mxu0 0.0
        %364 = vmatpush2.xpose.msra.mxu0 0.0
        %365 = vmatprep.subr.mxu0 0.0
        %366 = vmatpush2.xpose.msra.mxu0 0.0
        %367 = vmatprep.mubr.f32.mxu0 0.0
        %368 = vmatmul.mubr.f32.gmra.mxu0 %v302
        %v369 = vpop.f32.mrf.mxu0
        %v370 = vadd.f32 0.0, %v369
        %v371 = vpop.f32.mrf.mxu0
        %372 = vdwg.mxu0
        %s373 = smul.u32 %s20, 128
        %v374 = vlaneseq
        %v375 = vand.u32 %v374, 127
        %v376 = vstv %s373
        %v377 = vadd.s32 %v375, %v376
        %v378 = vld [vmem:[%s2] sm:$0xff]
        %379 = vset.pattern.permute.xlu0 0
        %380 = vperm.xlu0 %379, %v378
        %v381 = vpop.permute.xlu0 %380
        %vm382 = vcmp.eq.s32.totalorder %v377, %v381
        %v383 = vsub.f32 %v370, 15.0
        %v384 = vsel %vm382, %v383, %v370
        %385 = vst [vmem:[%s188] sm:$0xff] %v384
        %s386 = sand.u32 %s96, 1
        %s387 = scalar_lea.sflag [#allocation4], %s386
        %s388 = sand.u32 %s96, 1
        %s389 = smul.addr %s388, 8
        %s390 = scalar_lea.vmem [#allocation5], %s389
        // Predicated region
        $region37: #{cosface_forward.1} parent=31 // pred_check
          %p391 = pneg %p106
        $region38: #{cosface_forward.1} parent=31 // pred_check_branch
          %393 = sbr.rel (%p391) target = $region40
        $region39: #{cosface_forward.1} parent=31 // pred_region
          %s395 = ssub.s32 128, 128
          %396 = vsyncadd %s387, %s395
          %s397 = smul.addr %s20, 128
          %s398 = scalar_lea.hbm %s3, %s397
          %s400 = sshll.u32 %s390, 4
          %s401 = int_to_ptr.vmem [resolvable:$true] %s400
          %403 = dma.vmem_to_hbm [thread:$0]  %s401, 128, %s398, %s387
        $region40: #{cosface_forward.1} parent=31 // pred_fallthru
          _
      $region32: #{cosface_forward.1} parent=5 // pred_fallthru
        _
      %p404 = scmp.le.s32.totalorder 2, %s15
      // Predicated region
      $region41: #{cosface_forward.1} parent=5 // pred_check
        %p405 = pneg %p404
      $region42: #{cosface_forward.1} parent=5 // pred_check_branch
        %407 = sbr.rel (%p405) target = $region44
      $region43: #{cosface_forward.1} parent=5 // pred_region
        %s408 = ssub.s32 %s15, 2
        // Predicated region
        $region45: #{cosface_forward.1} parent=43 // pred_check
          %p409 = pneg %p112
        $region46: #{cosface_forward.1} parent=43 // pred_check_branch
          %411 = sbr.rel (%p409) target = $region48
        $region47: #{cosface_forward.1} parent=43 // pred_region
          %s412 = sand.u32 %s97, 1
          %s413 = scalar_lea.sflag [#allocation4], %s412
          %s414 = sand.u32 %s97, 1
          %s415 = smul.addr %s414, 8
          %s416 = scalar_lea.vmem [#allocation5], %s415
          %417 = dma.done %s413, 128
        $region48: #{cosface_forward.1} parent=43 // pred_fallthru
          _
      $region44: #{cosface_forward.1} parent=5 // pred_fallthru
        _
    $region6: #{cosface_forward.1} parent=1 // loop_footer
      %s19 = sadd.s32 1, %s15
    $region7: #{cosface_forward.1} parent=1 // loop_footer_branch
      %14 = sbr.rel target = $region3
    $region8: #{cosface_forward.1} parent=1 // loop_exit
      _
    %418 = vsyncpa [#allocation3], 1
    %s419 = scalar_lea.sflag [#allocation3], 1
    %420 = vsyncpa %s419, 1
    %421 = vsyncpa [#allocation4], 1
    %s422 = scalar_lea.sflag [#allocation4], 1
    %423 = vsyncpa %s422, 1

</llo_original>
